<compile_context>
chip_gen: v6e
topology: v6e:2x2x1
jax: 0.10.0
libtpu: 0.0.40
codegen_flags: <defaults>
</compile_context>

<pallas_src>
import functools

import jax
import jax.numpy as jnp
from jax.experimental import pallas as pl
from jax.experimental.pallas import tpu as pltpu


def _round_up(x, m):
    return ((x + m - 1) // m) * m


def _cdiv(a, b):
    return -(-a // b)


# ---------------------------------------------------------------------------
# Kernel
# ---------------------------------------------------------------------------
def mlp_kernel(x_ref, w1_ref, b1_ref, w2_ref, b2_ref, o_ref, acc_ref):
    """One (batch_tile x h_tile) step of y = relu(x @ W1 + b1) @ W2 + b2.

    grid = (num_batch_tiles, num_h_tiles); the trailing axis is a reduction
    over hidden-dim chunks accumulated into an f32 VMEM scratch.
    """
    j = pl.program_id(1)

    @pl.when(j == 0)
    def _():
        acc_ref[...] = jnp.zeros_like(acc_ref)

    # fc1 chunk: (TB, D) @ (D, TH) on the MXU. The x tile is cast to bf16
    # in-kernel (VPU work hidden under the MXU) instead of a separate XLA pass.
    h = jnp.dot(x_ref[...].astype(jnp.bfloat16), w1_ref[...],
                preferred_element_type=jnp.float32)
    h = jnp.maximum(h + b1_ref[...], 0.0)                 # bias + ReLU in f32

    # fc2 partial sum over this hidden chunk, accumulated in f32.
    acc_ref[...] += jnp.dot(h.astype(jnp.bfloat16), w2_ref[...],
                            preferred_element_type=jnp.float32)

    @pl.when(j == pl.num_programs(1) - 1)
    def _():
        o_ref[...] = (acc_ref[...] + b2_ref[...]).astype(o_ref.dtype)


# ---------------------------------------------------------------------------
# One-time parameter preparation (hoisted out of the forward pass)
# ---------------------------------------------------------------------------
def prepare_params(w1, b1, w2, b2):
    """Pad lane dims to multiples of 128 and cast MXU operands to bf16, once.

    Weights are stored (in_features, out_features) so the kernel computes
    x @ W + b. Doing this at init (not per call) avoids extra pad/convert
    kernels that would roughly double the weight HBM traffic every forward.
    """
    D, H = w1.shape
    Hw, O = w2.shape
    assert Hw == H, (w1.shape, w2.shape)
    Hp = _round_up(H, 128)
    Op = _round_up(O, 128)
    w1p = jnp.pad(w1, ((0, 0), (0, Hp - H))).astype(jnp.bfloat16)
    b1p = jnp.pad(jnp.reshape(b1, (1, H)), ((0, 0), (0, Hp - H))).astype(jnp.float32)
    w2p = jnp.pad(w2, ((0, Hp - H), (0, Op - O))).astype(jnp.bfloat16)
    b2p = jnp.pad(jnp.reshape(b2, (1, O)), ((0, 0), (0, Op - O))).astype(jnp.float32)
    return w1p, b1p, w2p, b2p


# ---------------------------------------------------------------------------
# Tiling / VMEM heuristics
# ---------------------------------------------------------------------------
def _vmem_limit_bytes():
    # Budget against the chip's actual VMEM with headroom for compiler scratch
    # and spills; never the full physical capacity (critical on v7x = 64 MiB).
    try:
        cap = pltpu.get_tpu_info().vmem_capacity_bytes
    except Exception:
        cap = 64 * 1024 * 1024          # conservative fallback (v7x per-core)
    return int(cap * 3 // 4)


def _tile_vmem_bytes(tb, d, th, op, x_isz, o_isz):
    # Weights/biases are budgeted as double-buffered blocks (default pipeline);
    # the H-tiling fallback below bounds this footprint when H is large.
    wb = 2 * ((d * th + th * op) * 2 + (th + op) * 4)
    xb = 2 * tb * d * x_isz             # double-buffered x tiles
    ob = 2 * tb * op * o_isz            # double-buffered out tiles
    acc = tb * op * 4                   # f32 accumulator scratch
    act = tb * th * (4 + 2)             # f32 fc1 activation + bf16 copy
    return wb + xb + ob + acc + act


def _default_batch_tile(B):
    if B <= 32:
        return _round_up(B, 8)
    # Aim for >= ~4 grid steps (DMA/compute overlap; >= 2 also feeds both v7x
    # TensorCores), 16-row multiples (bf16 sublane packing), cap at 1024 rows.
    return min(1024, _round_up(_cdiv(B, 4), 16))


def _pick_h_tile(Hp, fits):
    # Largest multiple of 128 that divides padded H and fits the VMEM budget.
    # When it equals Hp the hidden grid axis collapses to one step and the
    # weights stay fully resident (constant index_map -> DMA'd once).
    for th in range(Hp, 0, -128):
        if Hp % th == 0 and fits(th):
            return th
    return 128


# ---------------------------------------------------------------------------
# Forward pass
# ---------------------------------------------------------------------------
def mlp_forward_pallas(x, w1p, b1p, w2p, b2p, *, out_features,
                       batch_tile=None, h_tile=None, out_dtype=None):
    B, D = x.shape
    Dw, Hp = w1p.shape
    Op = w2p.shape[1]
    if D != Dw:
        raise ValueError(f"x feature dim {D} != weight in-dim {Dw}")
    out_dtype = x.dtype if out_dtype is None else jnp.dtype(out_dtype)

    vmem_limit = _vmem_limit_bytes()
    usable = int(vmem_limit * 3 // 4)   # slack inside the scoped limit

    if batch_tile is None:
        tb = _default_batch_tile(B)
    else:
        tb = _round_up(max(int(batch_tile), 8), 8)   # respect (8,128) tiling
    tb = min(tb, _round_up(B, 8))

    x_isz = jnp.dtype(x.dtype).itemsize
    o_isz = jnp.dtype(out_dtype).itemsize

    if h_tile is None:
        th = _pick_h_tile(
            Hp, lambda t: _tile_vmem_bytes(tb, D, t, Op, x_isz, o_isz) <= usable)
    else:
        th = int(h_tile)
        if th % 128 != 0 or Hp % th != 0:
            raise ValueError(
                f"h_tile={th} must be a multiple of 128 dividing padded H={Hp}")

    # If even the smallest hidden chunk overflows the budget, shrink the batch tile.
    while tb > 16 and _tile_vmem_bytes(tb, D, th, Op, x_isz, o_isz) > usable:
        tb = max(16, _round_up(tb // 2, 16))

    nb = _cdiv(B, tb)
    nh = Hp // th
    grid = (nb, nh)

    # Advisory cost from true shapes (no batch padding; lane padding is real work).
    flops = 2 * B * D * Hp + 2 * B * Hp * Op
    bytes_accessed = (x.size * x_isz
                      + (w1p.size + w2p.size) * 2
                      + (b1p.size + b2p.size) * 4
                      + B * Op * o_isz)

    out_p = pl.pallas_call(
        mlp_kernel,
        out_shape=jax.ShapeDtypeStruct((B, Op), out_dtype),
        grid_spec=pltpu.PrefetchScalarGridSpec(
            num_scalar_prefetch=0,
            grid=grid,
            in_specs=[
                pl.BlockSpec((tb, D), lambda i, j: (i, 0)),    # x tile (resident over j)
                pl.BlockSpec((D, th), lambda i, j: (0, j)),    # W1 chunk
                pl.BlockSpec((1, th), lambda i, j: (0, j)),    # b1 chunk
                pl.BlockSpec((th, Op), lambda i, j: (j, 0)),   # W2 chunk
                pl.BlockSpec((1, Op), lambda i, j: (0, 0)),    # b2 (resident)
            ],
            out_specs=pl.BlockSpec((tb, Op), lambda i, j: (i, 0)),
            scratch_shapes=[pltpu.VMEM((tb, Op), jnp.float32)],
        ),
        compiler_params=pltpu.CompilerParams(
            dimension_semantics=("parallel", "arbitrary"),
            vmem_limit_bytes=vmem_limit,
        ),
        cost_estimate=pl.CostEstimate(
            flops=flops, transcendentals=0, bytes_accessed=bytes_accessed),
    )(x, w1p, b1p, w2p, b2p)

    # Strip lane padding of the output dim.
    return out_p[:, :out_features]


def mlp_forward(x, w1p, b1p, w2p, b2p, *, out_features, **kwargs):
    """Size-gated entry point: for tiny problems the pallas_call fixed cost and
    128-lane padding dominate, so use a fused XLA dot; realistic sizes use the
    Pallas kernel."""
    B = x.shape[0]
    if B < 256:
        h = jnp.maximum(jnp.dot(x, w1p.astype(x.dtype)) + b1p, 0.0)
        y = jnp.dot(h, w2p.astype(x.dtype)) + b2p
        return y[:, :out_features].astype(x.dtype)
    return mlp_forward_pallas(x, w1p, b1p, w2p, b2p,
                              out_features=out_features, **kwargs)


# ---------------------------------------------------------------------------
# Demo / self-check
# ---------------------------------------------------------------------------
def init_params(key, input_dim, hidden_dim, output_dim):
    # Mirrors nn.Linear's U(-1/sqrt(fan_in), 1/sqrt(fan_in)) init; weights are
    # stored (in_features, out_features) so the kernel computes x @ W + b.
    k1, k2, k3, k4 = jax.random.split(key, 4)
    s1 = 1.0 / float(input_dim) ** 0.5
    s2 = 1.0 / float(hidden_dim) ** 0.5
    w1 = jax.random.uniform(k1, (input_dim, hidden_dim), jnp.float32, -s1, s1)
    b1 = jax.random.uniform(k2, (hidden_dim,), jnp.float32, -s1, s1)
    w2 = jax.random.uniform(k3, (hidden_dim, output_dim), jnp.float32, -s2, s2)
    b2 = jax.random.uniform(k4, (output_dim,), jnp.float32, -s2, s2)
    return w1, b1, w2, b2


if __name__ == "__main__":
    input_dim, hidden_dim, output_dim = 32, 256, 16
    batch = 64

    key = jax.random.PRNGKey(0)
    kx, kp = jax.random.split(key)
    x = jax.random.normal(kx, (batch, input_dim), jnp.float32)
    w1, b1, w2, b2 = init_params(kp, input_dim, hidden_dim, output_dim)

    # One-time weight prep (pad + bf16 cast) -- hoisted out of the forward.
    params = prepare_params(w1, b1, w2, b2)

    # Default path: weights resident, batch tiled into 4 grid steps.
    fwd = jax.jit(functools.partial(mlp_forward_pallas, out_features=output_dim))
    out = fwd(x, *params)
    jax.block_until_ready(out)
    assert out.shape == (batch, output_dim), out.shape

    # Also exercise the hidden-dim-tiled (accumulator) fallback path.
    fwd_htiled = jax.jit(functools.partial(
        mlp_forward_pallas, out_features=output_dim, h_tile=128))
    out_h = fwd_htiled(x, *params)
    jax.block_until_ready(out_h)
    assert out_h.shape == (batch, output_dim), out_h.shape

    # Reference 1: same bf16-operand / f32-accumulation math in plain JAX.
    xb, w1b, w2b = (a.astype(jnp.bfloat16) for a in (x, w1, w2))
    h_ref = jnp.maximum(
        jnp.dot(xb, w1b, preferred_element_type=jnp.float32) + b1, 0.0)
    ref_bf16 = jnp.dot(h_ref.astype(jnp.bfloat16), w2b,
                       preferred_element_type=jnp.float32) + b2
    assert jnp.allclose(out, ref_bf16, atol=2e-2, rtol=2e-2)
    assert jnp.allclose(out_h, ref_bf16, atol=2e-2, rtol=2e-2)

    # Reference 2: full-f32 PyTorch-equivalent math (loose tol for bf16 MXU).
    ref_f32 = jnp.maximum(x @ w1 + b1, 0.0) @ w2 + b2
    assert jnp.allclose(out, ref_f32, atol=1.5e-1, rtol=1e-1)

    print("KERNEL_OK")
</pallas_src>

<mosaic_0001>
module attributes {stable_mosaic.version = 11 : i64} {
  func.func @mlp_kernel(%arg0: i32, %arg1: i32, %arg2: memref<16x32xf32, #tpu.memory_space<vmem>>, %arg3: memref<32x256xbf16, #tpu.memory_space<vmem>>, %arg4: memref<1x256xf32, #tpu.memory_space<vmem>>, %arg5: memref<256x128xbf16, #tpu.memory_space<vmem>>, %arg6: memref<1x128xf32, #tpu.memory_space<vmem>>, %arg7: memref<16x128xf32, #tpu.memory_space<vmem>>, %arg8: memref<16x128xf32, #tpu.memory_space<vmem>>) attributes {dimension_semantics = [#tpu.dimension_semantics<parallel>, #tpu.dimension_semantics<arbitrary>], iteration_bounds = array<i64: 4, 1>, scalar_prefetch = 0 : i64, scratch_operands = 1 : i64, tpu.core_type = #tpu.core_type<tc>, window_params = [{transform_indices = @transform_0, window_bounds = array<i64: 16, 32>}, {transform_indices = @transform_1, window_bounds = array<i64: 32, 256>}, {transform_indices = @transform_2, window_bounds = array<i64: 1, 256>}, {transform_indices = @transform_3, window_bounds = array<i64: 256, 128>}, {pipeline_mode = #tpu.pipeline_mode<synchronous>, transform_indices = @transform_4, window_bounds = array<i64: 1, 128>}, {transform_indices = @transform_5, window_bounds = array<i64: 16, 128>}]} {
    %c0_i32 = arith.constant 0 : i32
    %0 = arith.cmpi eq, %arg1, %c0_i32 : i32
    %1 = arith.extui %0 : i1 to i32
    %c0_i32_0 = arith.constant 0 : i32
    %2 = arith.cmpi ne, %1, %c0_i32_0 : i32
    scf.if %2 {
      %cst_16 = arith.constant 0.000000e+00 : f32
      %21 = vector.broadcast %cst_16 : f32 to vector<16x128xf32>
      %c0_17 = arith.constant 0 : index
      %c0_18 = arith.constant 0 : index
      %22 = vector.load %arg8[%c0_17, %c0_18] : memref<16x128xf32, #tpu.memory_space<vmem>>, vector<16x128xf32>
      tpu.vector_store %arg8[%c0_17, %c0_18], %21 {strides = array<i32>} : memref<16x128xf32, #tpu.memory_space<vmem>>, vector<16x128xf32>,
    } else {
    }
    %c0 = arith.constant 0 : index
    %c0_1 = arith.constant 0 : index
    %3 = vector.load %arg2[%c0, %c0_1] : memref<16x32xf32, #tpu.memory_space<vmem>>, vector<16x32xf32>
    %4 = arith.truncf %3 : vector<16x32xf32> to vector<16x32xbf16>
    %c0_2 = arith.constant 0 : index
    %c0_3 = arith.constant 0 : index
    %5 = vector.load %arg3[%c0_2, %c0_3] : memref<32x256xbf16, #tpu.memory_space<vmem>>, vector<32x256xbf16>
    %cst = arith.constant dense<0.000000e+00> : vector<16x256xf32>
    %6 = tpu.matmul %4, %5, %cst {dimension_numbers = #tpu.dot_dimension_numbers<[1], [0], [0], [1], [0, 0, 1, 1], [], []>} : vector<16x32xbf16>, vector<32x256xbf16>, vector<16x256xf32> -> vector<16x256xf32>
    %c0_4 = arith.constant 0 : index
    %c0_5 = arith.constant 0 : index
    %7 = vector.load %arg4[%c0_4, %c0_5] : memref<1x256xf32, #tpu.memory_space<vmem>>, vector<1x256xf32>
    %8 = vector.broadcast %7 : vector<1x256xf32> to vector<16x256xf32>
    %9 = arith.addf %6, %8 : vector<16x256xf32>
    %cst_6 = arith.constant 0.000000e+00 : f32
    %10 = vector.broadcast %cst_6 : f32 to vector<16x256xf32>
    %11 = arith.maximumf %9, %10 : vector<16x256xf32>
    %c0_7 = arith.constant 0 : index
    %c0_8 = arith.constant 0 : index
    %12 = vector.load %arg8[%c0_7, %c0_8] : memref<16x128xf32, #tpu.memory_space<vmem>>, vector<16x128xf32>
    %13 = arith.truncf %11 : vector<16x256xf32> to vector<16x256xbf16>
    %c0_9 = arith.constant 0 : index
    %c0_10 = arith.constant 0 : index
    %14 = vector.load %arg5[%c0_9, %c0_10] : memref<256x128xbf16, #tpu.memory_space<vmem>>, vector<256x128xbf16>
    %cst_11 = arith.constant dense<0.000000e+00> : vector<16x128xf32>
    %15 = tpu.matmul %13, %14, %cst_11 {dimension_numbers = #tpu.dot_dimension_numbers<[1], [0], [0], [1], [0, 0, 1, 1], [], []>} : vector<16x256xbf16>, vector<256x128xbf16>, vector<16x128xf32> -> vector<16x128xf32>
    %16 = arith.addf %12, %15 : vector<16x128xf32>
    %c0_12 = arith.constant 0 : index
    %c0_13 = arith.constant 0 : index
    %17 = vector.load %arg8[%c0_12, %c0_13] : memref<16x128xf32, #tpu.memory_space<vmem>>, vector<16x128xf32>
    tpu.vector_store %arg8[%c0_12, %c0_13], %16 {strides = array<i32>} : memref<16x128xf32, #tpu.memory_space<vmem>>, vector<16x128xf32>,
    %c0_i32_14 = arith.constant 0 : i32
    %18 = arith.cmpi eq, %arg1, %c0_i32_14 : i32
    %19 = arith.extui %18 : i1 to i32
    %c0_i32_15 = arith.constant 0 : i32
    %20 = arith.cmpi ne, %19, %c0_i32_15 : i32
    scf.if %20 {
      %c0_16 = arith.constant 0 : index
      %c0_17 = arith.constant 0 : index
      %21 = vector.load %arg8[%c0_16, %c0_17] : memref<16x128xf32, #tpu.memory_space<vmem>>, vector<16x128xf32>
      %c0_18 = arith.constant 0 : index
      %c0_19 = arith.constant 0 : index
      %22 = vector.load %arg6[%c0_18, %c0_19] : memref<1x128xf32, #tpu.memory_space<vmem>>, vector<1x128xf32>
      %23 = vector.broadcast %22 : vector<1x128xf32> to vector<16x128xf32>
      %24 = arith.addf %21, %23 : vector<16x128xf32>
      %c0_20 = arith.constant 0 : index
      %c0_21 = arith.constant 0 : index
      %25 = vector.load %arg7[%c0_20, %c0_21] : memref<16x128xf32, #tpu.memory_space<vmem>>, vector<16x128xf32>
      tpu.vector_store %arg7[%c0_20, %c0_21], %24 {strides = array<i32>} : memref<16x128xf32, #tpu.memory_space<vmem>>, vector<16x128xf32>,
    } else {
    }
    return
  }
  func.func @transform_0(%arg0: i32, %arg1: i32) -> (i32, i32) {
    %c0_i32 = arith.constant 0 : i32
    %c0_i32_0 = arith.constant 0 : i32
    return %arg0, %c0_i32 : i32, i32
  }
  func.func @transform_1(%arg0: i32, %arg1: i32) -> (i32, i32) {
    %c0_i32 = arith.constant 0 : i32
    %c0_i32_0 = arith.constant 0 : i32
    return %c0_i32, %arg1 : i32, i32
  }
  func.func @transform_2(%arg0: i32, %arg1: i32) -> (i32, i32) {
    %c0_i32 = arith.constant 0 : i32
    %c0_i32_0 = arith.constant 0 : i32
    return %c0_i32, %arg1 : i32, i32
  }
  func.func @transform_3(%arg0: i32, %arg1: i32) -> (i32, i32) {
    %c0_i32 = arith.constant 0 : i32
    %c0_i32_0 = arith.constant 0 : i32
    return %arg1, %c0_i32 : i32, i32
  }
  func.func @transform_4(%arg0: i32, %arg1: i32) -> (i32, i32) {
    %c0_i32 = arith.constant 0 : i32
    %c0_i32_0 = arith.constant 0 : i32
    %c0_i32_1 = arith.constant 0 : i32
    return %c0_i32, %c0_i32_0 : i32, i32
  }
  func.func @transform_5(%arg0: i32, %arg1: i32) -> (i32, i32) {
    %c0_i32 = arith.constant 0 : i32
    %c0_i32_0 = arith.constant 0 : i32
    return %arg0, %c0_i32 : i32, i32
  }
}

</mosaic_0001>

<llo_original>
// kernel: mlp_forward_pallas.1
$region0: #{mlp_forward_pallas.1}
  #allocation0 [shape = 'u32[]', space=smem, size = 0x4, offset = 0x4, fixed_abs, tag = 'smem constant byte address 0x4 - core index']
  #allocation1 [shape = 'u32[144,128]{1,0:T(1,128)}', space=vmem, size = 0x12000, scoped, tag = 'internal scratch']
  #allocation2 [shape = 'f32[16,128]{1,0:T(8,128)}', space=vmem, size = 0x2000, scoped, tag = 'scratch operand']
  %s0 = inlined_call_operand.vmem [shape: f32[64,32], index: 0, kind: input, shape index: {}]
  %s1 = inlined_call_operand.vmem [shape: bf16[32,256], index: 1, kind: input, shape index: {}]
  %s2 = inlined_call_operand.vmem [shape: f32[1,256], index: 2, kind: input, shape index: {}]
  %s3 = inlined_call_operand.hbm [shape: bf16[256,128], index: 3, kind: input, shape index: {}]
  %s4 = inlined_call_operand.vmem [shape: f32[1,128], index: 4, kind: input, shape index: {}]
  %s5 = inlined_call_operand.vmem [shape: f32[64,128], index: 5, kind: output, shape index: {}]
  %s6 = sld [smem:[#allocation0]]
  $region65: #{mlp_forward_pallas.1} parent=0
    _
  %s8 = ssub.s32 1, %s6
  %s9 = scalar_select 0, %s8, %s6
  $region1: #{mlp_forward_pallas.1} parent=0
    #allocation3 [shape = 'u8[65536]{0}', space=vmem, size = 0x10000, scoped, tag = 'input window, operand 3, single buffered']
    #allocation4 [shape = 's32[2]{0}', space=sflag, size = 0x8, scoped, tag = 'scoped memory for mlp_forward_pallas.1']
    %10 = vsyncpa [#allocation4], 0
    loop: start=0, step=1, limit=6
    $region2: #{mlp_forward_pallas.1} parent=1 // loop_pre_header
      _
    $region3: #{mlp_forward_pallas.1} parent=1 // loop_header
      %s12 = sphi 0, %s16
      %p13 = scmp.ge.s32.totalorder %s12, 6
      %s19 = sphi 0, %s31
      %s20 = sphi 0, %s27
      %s21 = sphi 0, %s19
      %s22 = sphi 0, %s20
      %s23 = sphi 0, %s21
      %s24 = sphi 0, %s22
      %s34 = sphi 0, %s36
      %s37 = sphi 0, %s34
      %s38 = sphi 0, %s37
      %s54 = sphi 0, %s38
      %s60 = sphi 0, %s62
      %s63 = sphi 0, %s60
      %s64 = sphi 0, %s63
      %s80 = sphi 0, %s64
      %s86 = sphi 0, %s88
      %s89 = sphi 0, %s86
      %s90 = sphi 0, %s89
      %s106 = sphi 0, %s90
      %s112 = sphi 0, %s114
      %s115 = sphi 0, %s112
      %s116 = sphi 0, %s115
      %s132 = sphi 0, %s116
      %s136 = sphi 0, %s136
      %s138 = sphi 0, %s136
      %s139 = sphi 0, %s138
      %s153 = sphi 0, %s139
      %s159 = sphi 0, %s161
      %s162 = sphi 0, %s159
      %s163 = sphi 0, %s162
      %s179 = sphi 0, %s163
    $region4: #{mlp_forward_pallas.1} parent=1 // loop_header_branch
      %15 = sbr.rel (%p13) target = $region8
    $region5: #{mlp_forward_pallas.1} parent=1 // loop_body
      %s17 = ssub.s32 %s12, 1
      %s18 = ssub.s32 %s12, 2
      %s25 = sadd.s32 1, %s20
      %p26 = scmp.ge.s32.totalorder %s25, 1
      %s27 = scalar_select %p26, 0, %s25
      %s28 = sadd.s32 1, %s19
      %s29 = scalar_select %p26, %s28, %s19
      %p30 = scmp.ge.s32.totalorder %s29, 4
      %s31 = scalar_select %p30, 0, %s29
      %s32 = ssub.s32 %s19, %s31
      %p33 = scmp.eq.s32.totalorder %s32, 0
      %s35 = sadd.s32 %s34, 1
      %s36 = scalar_select %p33, %s34, %s35
      %p39 = pneg %p33
      %p40 = scmp.eq.s32.totalorder %s12, 3
      %p41 = por %p39, %p40
      %p42 = scmp.ne.s32.totalorder %s34, %s37
      %p43 = scmp.eq.s32.totalorder %s12, 0
      %p44 = por %p42, %p43
      %p45 = scmp.ne.s32.totalorder %s34, %s37
      %p46 = scmp.eq.s32.totalorder %s17, 3
      %p47 = por %p45, %p46
      %p48 = scmp.ne.s32.totalorder %s37, %s38
      %p49 = scmp.eq.s32.totalorder %s17, 0
      %p50 = por %p48, %p49
      %p51 = scmp.ne.s32.totalorder %s37, %s38
      %p52 = scmp.eq.s32.totalorder %s18, 3
      %p53 = por %p51, %p52
      %p55 = scmp.ne.s32.totalorder %s38, %s54
      %p56 = scmp.eq.s32.totalorder %s18, 0
      %p57 = por %p55, %p56
      %s58 = ssub.s32 %s20, %s27
      %p59 = scmp.eq.s32.totalorder %s58, 0
      %s61 = sadd.s32 %s60, 1
      %s62 = scalar_select %p59, %s60, %s61
      %p65 = pneg %p59
      %p66 = scmp.eq.s32.totalorder %s12, 3
      %p67 = por %p65, %p66
      %p68 = scmp.ne.s32.totalorder %s60, %s63
      %p69 = scmp.eq.s32.totalorder %s12, 0
      %p70 = por %p68, %p69
      %p71 = scmp.ne.s32.totalorder %s60, %s63
      %p72 = scmp.eq.s32.totalorder %s17, 3
      %p73 = por %p71, %p72
      %p74 = scmp.ne.s32.totalorder %s63, %s64
      %p75 = scmp.eq.s32.totalorder %s17, 0
      %p76 = por %p74, %p75
      %p77 = scmp.ne.s32.totalorder %s63, %s64
      %p78 = scmp.eq.s32.totalorder %s18, 3
      %p79 = por %p77, %p78
      %p81 = scmp.ne.s32.totalorder %s64, %s80
      %p82 = scmp.eq.s32.totalorder %s18, 0
      %p83 = por %p81, %p82
      %s84 = ssub.s32 %s20, %s27
      %p85 = scmp.eq.s32.totalorder %s84, 0
      %s87 = sadd.s32 %s86, 1
      %s88 = scalar_select %p85, %s86, %s87
      %p91 = pneg %p85
      %p92 = scmp.eq.s32.totalorder %s12, 3
      %p93 = por %p91, %p92
      %p94 = scmp.ne.s32.totalorder %s86, %s89
      %p95 = scmp.eq.s32.totalorder %s12, 0
      %p96 = por %p94, %p95
      %p97 = scmp.ne.s32.totalorder %s86, %s89
      %p98 = scmp.eq.s32.totalorder %s17, 3
      %p99 = por %p97, %p98
      %p100 = scmp.ne.s32.totalorder %s89, %s90
      %p101 = scmp.eq.s32.totalorder %s17, 0
      %p102 = por %p100, %p101
      %p103 = scmp.ne.s32.totalorder %s89, %s90
      %p104 = scmp.eq.s32.totalorder %s18, 3
      %p105 = por %p103, %p104
      %p107 = scmp.ne.s32.totalorder %s90, %s106
      %p108 = scmp.eq.s32.totalorder %s18, 0
      %p109 = por %p107, %p108
      %s110 = ssub.s32 %s20, %s27
      %p111 = scmp.eq.s32.totalorder %s110, 0
      %s113 = sadd.s32 %s112, 1
      %s114 = scalar_select %p111, %s112, %s113
      %p117 = pneg %p111
      %p118 = scmp.eq.s32.totalorder %s12, 3
      %p119 = por %p117, %p118
      %p120 = scmp.ne.s32.totalorder %s112, %s115
      %p121 = scmp.eq.s32.totalorder %s12, 0
      %p122 = por %p120, %p121
      %p123 = scmp.ne.s32.totalorder %s112, %s115
      %p124 = scmp.eq.s32.totalorder %s17, 3
      %p125 = por %p123, %p124
      %p126 = scmp.ne.s32.totalorder %s115, %s116
      %p127 = scmp.eq.s32.totalorder %s17, 0
      %p128 = por %p126, %p127
      %p129 = scmp.ne.s32.totalorder %s115, %s116
      %p130 = scmp.eq.s32.totalorder %s18, 3
      %p131 = por %p129, %p130
      %p133 = scmp.ne.s32.totalorder %s116, %s132
      %p134 = scmp.eq.s32.totalorder %s18, 0
      %p135 = por %p133, %p134
      %s137 = sadd.s32 %s136, 1
      %p140 = scmp.eq.s32.totalorder %s12, 3
      %p141 = scmp.ne.s32.totalorder %s136, %s138
      %p142 = scmp.eq.s32.totalorder %s12, 0
      %p143 = por %p141, %p142
      %p144 = scmp.ne.s32.totalorder %s136, %s138
      %p145 = scmp.eq.s32.totalorder %s17, 3
      %p146 = por %p144, %p145
      %p147 = scmp.ne.s32.totalorder %s138, %s139
      %p148 = scmp.eq.s32.totalorder %s17, 0
      %p149 = por %p147, %p148
      %p150 = scmp.ne.s32.totalorder %s138, %s139
      %p151 = scmp.eq.s32.totalorder %s18, 3
      %p152 = por %p150, %p151
      %p154 = scmp.ne.s32.totalorder %s139, %s153
      %p155 = scmp.eq.s32.totalorder %s18, 0
      %p156 = por %p154, %p155
      %s157 = ssub.s32 %s19, %s31
      %p158 = scmp.eq.s32.totalorder %s157, 0
      %s160 = sadd.s32 %s159, 1
      %s161 = scalar_select %p158, %s159, %s160
      %p164 = pneg %p158
      %p165 = scmp.eq.s32.totalorder %s12, 3
      %p166 = por %p164, %p165
      %p167 = scmp.ne.s32.totalorder %s159, %s162
      %p168 = scmp.eq.s32.totalorder %s12, 0
      %p169 = por %p167, %p168
      %p170 = scmp.ne.s32.totalorder %s159, %s162
      %p171 = scmp.eq.s32.totalorder %s17, 3
      %p172 = por %p170, %p171
      %p173 = scmp.ne.s32.totalorder %s162, %s163
      %p174 = scmp.eq.s32.totalorder %s17, 0
      %p175 = por %p173, %p174
      %p176 = scmp.ne.s32.totalorder %s162, %s163
      %p177 = scmp.eq.s32.totalorder %s18, 3
      %p178 = por %p176, %p177
      %p180 = scmp.ne.s32.totalorder %s163, %s179
      %p181 = scmp.eq.s32.totalorder %s18, 0
      %p182 = por %p180, %p181
      %p183 = scmp.le.s32.totalorder 1, %s12
      %p184 = scmp.lt.s32.totalorder %s12, 5
      %p185 = pnand %p183, %p184
      %p186 = pneg %p185
      // Predicated region
      $region9: #{mlp_forward_pallas.1} parent=5 // pred_check
        _
      $region10: #{mlp_forward_pallas.1} parent=5 // pred_check_branch
        %188 = sbr.rel (%p185) target = $region12
      $region11: #{mlp_forward_pallas.1} parent=5 // pred_region
        %s189 = ssub.s32 %s12, 1
        // Predicated region
        $region13: #{mlp_forward_pallas.1} parent=11 // pred_check
          %p190 = pneg %p76
        $region14: #{mlp_forward_pallas.1} parent=11 // pred_check_branch
          %192 = sbr.rel (%p190) target = $region16
        $region15: #{mlp_forward_pallas.1} parent=11 // pred_region
          %s193 = smul.u32 2, %s22
          %p194 = scmp.lt.s32.totalorder %s193, 1
          %s195 = scalar_select %p194, %s193, 1
          %s196 = smul.addr %s195, 4
          %s197 = scalar_lea.vmem %s1, %s196
          %s198 = smul.u32 2, %s22
        $region16: #{mlp_forward_pallas.1} parent=11 // pred_fallthru
          _
        // Predicated region
        $region17: #{mlp_forward_pallas.1} parent=11 // pred_check
          %p199 = pneg %p102
        $region18: #{mlp_forward_pallas.1} parent=11 // pred_check_branch
          %201 = sbr.rel (%p199) target = $region20
        $region19: #{mlp_forward_pallas.1} parent=11 // pred_region
          %s202 = smul.u32 2, %s22
          %p203 = scmp.lt.s32.totalorder %s202, 1
          %s204 = scalar_select %p203, %s202, 1
          %s205 = scalar_lea.vmem %s2, %s204
          %s206 = smul.u32 2, %s22
        $region20: #{mlp_forward_pallas.1} parent=11 // pred_fallthru
          _
        // Predicated region
        $region21: #{mlp_forward_pallas.1} parent=11 // pred_check
          %p207 = pneg %p128
        $region22: #{mlp_forward_pallas.1} parent=11 // pred_check_branch
          %209 = sbr.rel (%p207) target = $region24
        $region23: #{mlp_forward_pallas.1} parent=11 // pred_region
          %s210 = smul.u32 32, %s22
          %s212 = ssub.s32 2048, 2048
          %213 = vsyncadd [#allocation4], %s212
          %s214 = smul.addr %s210, 64
          %s215 = scalar_lea.hbm %s3, %s214
          %s216 = sshll.u32 [#allocation3], 4
          %s217 = int_to_ptr.vmem [resolvable:$true] %s216
          %222 = dma.hbm_to_vmem [thread:$0]  %s215, 2048, %s217, [#allocation4], 64, 64, 4
        $region24: #{mlp_forward_pallas.1} parent=11 // pred_fallthru
          _
        // Predicated region
        $region25: #{mlp_forward_pallas.1} parent=11 // pred_check
          %p223 = pneg %p149
        $region26: #{mlp_forward_pallas.1} parent=11 // pred_check_branch
          %225 = sbr.rel (%p223) target = $region28
        $region27: #{mlp_forward_pallas.1} parent=11 // pred_region
          _
        $region28: #{mlp_forward_pallas.1} parent=11 // pred_fallthru
          _
      $region12: #{mlp_forward_pallas.1} parent=5 // pred_fallthru
        _
      %p226 = scmp.lt.s32.totalorder %s12, 4
      // Predicated region
      $region29: #{mlp_forward_pallas.1} parent=5 // pred_check
        %p227 = pneg %p226
      $region30: #{mlp_forward_pallas.1} parent=5 // pred_check_branch
        %229 = sbr.rel (%p227) target = $region32
      $region31: #{mlp_forward_pallas.1} parent=5 // pred_region
        // Predicated region
        $region33: #{mlp_forward_pallas.1} parent=31 // pred_check
          %p230 = pneg %p44
        $region34: #{mlp_forward_pallas.1} parent=31 // pred_check_branch
          %232 = sbr.rel (%p230) target = $region36
        $region35: #{mlp_forward_pallas.1} parent=31 // pred_region
          %s233 = smul.u32 2, %s19
          %p234 = scmp.lt.s32.totalorder %s233, 7
          %s235 = scalar_select %p234, %s233, 7
          %s236 = smul.addr %s235, 8
          %s237 = scalar_lea.vmem %s0, %s236
          %s238 = smul.u32 2, %s19
        $region36: #{mlp_forward_pallas.1} parent=31 // pred_fallthru
          _
      $region32: #{mlp_forward_pallas.1} parent=5 // pred_fallthru
        _
      %p239 = scmp.le.s32.totalorder 1, %s12
      %p240 = scmp.lt.s32.totalorder %s12, 5
      %p241 = pnand %p239, %p240
      %p242 = pneg %p241
      // Predicated region
      $region37: #{mlp_forward_pallas.1} parent=5 // pred_check
        _
      $region38: #{mlp_forward_pallas.1} parent=5 // pred_check_branch
        %244 = sbr.rel (%p241) target = $region40
      $region39: #{mlp_forward_pallas.1} parent=5 // pred_region
        %s245 = ssub.s32 %s12, 1
        // Predicated region
        $region41: #{mlp_forward_pallas.1} parent=39 // pred_check
          %p246 = pneg %p128
        $region42: #{mlp_forward_pallas.1} parent=39 // pred_check_branch
          %248 = sbr.rel (%p246) target = $region44
        $region43: #{mlp_forward_pallas.1} parent=39 // pred_region
          %249 = dma.done [#allocation4], 2048
        $region44: #{mlp_forward_pallas.1} parent=39 // pred_fallthru
          _
        %s250 = smul.u32 2, %s21
        %p251 = scmp.lt.s32.totalorder %s250, 7
        %s252 = scalar_select %p251, %s250, 7
        %s253 = smul.addr %s252, 8
        %s254 = scalar_lea.vmem %s0, %s253
        %p255 = pneg %p50
        %p256 = pneg %p47
        %s257 = smul.u32 2, %s22
        %p258 = scmp.lt.s32.totalorder %s257, 1
        %s259 = scalar_select %p258, %s257, 1
        %s260 = smul.addr %s259, 4
        %s261 = scalar_lea.vmem %s1, %s260
        %p262 = pneg %p76
        %p263 = pneg %p73
        %s264 = smul.u32 2, %s22
        %p265 = scmp.lt.s32.totalorder %s264, 1
        %s266 = scalar_select %p265, %s264, 1
        %s267 = scalar_lea.vmem %s2, %s266
        %p268 = pneg %p102
        %p269 = pneg %p99
        %p270 = pneg %p128
        %p271 = pneg %p125
        %p272 = pneg %p149
        %p273 = pneg %p146
        %p274 = pneg %p175
        %p275 = pneg %p172
        %s276 = smul.u32 2, %s21
        %p277 = scmp.lt.s32.totalorder %s276, 7
        %s278 = scalar_select %p277, %s276, 7
        %s279 = smul.addr %s278, 8
        %s280 = scalar_lea.vmem %s5, %s279
        %s281 = smul.u32 2, %s21
        %p282 = scmp.lt.s32.totalorder %s281, 7
        %s283 = scalar_select %p282, %s281, 7
        %s284 = smul.addr %s283, 8
        %s285 = scalar_lea.vmem %s0, %s284
        %s286 = smul.u32 2, %s21
        %s287 = smul.u32 2, %s22
        %p288 = scmp.lt.s32.totalorder %s287, 1
        %s289 = scalar_select %p288, %s287, 1
        %s290 = smul.addr %s289, 4
        %s291 = scalar_lea.vmem %s1, %s290
        %s292 = smul.u32 2, %s22
        %s293 = smul.u32 2, %s22
        %p294 = scmp.lt.s32.totalorder %s293, 1
        %s295 = scalar_select %p294, %s293, 1
        %s296 = scalar_lea.vmem %s2, %s295
        %s297 = smul.u32 2, %s22
        %s298 = smul.u32 32, %s22
        %s299 = smul.u32 2, %s21
        %p300 = scmp.lt.s32.totalorder %s299, 7
        %s301 = scalar_select %p300, %s299, 7
        %s302 = smul.addr %s301, 8
        %s303 = scalar_lea.vmem %s5, %s302
        %s304 = smul.u32 2, %s21
        %p306 = scmp.eq.s32.totalorder %s22, 0
        // Predicated region
        $region45: #{mlp_forward_pallas.1} parent=39 // pred_check
          %p307 = pneg %p306
        $region46: #{mlp_forward_pallas.1} parent=39 // pred_check_branch
          %309 = sbr.rel (%p307) target = $region48
        $region47: #{mlp_forward_pallas.1} parent=39 // pred_region
          %310 = vst [vmem:[#allocation2] sm:$0xff] 0.0
          %311 = vst [vmem:[#allocation2 + $0x8] sm:$0xff] 0.0
        $region48: #{mlp_forward_pallas.1} parent=39 // pred_fallthru
          _
        %v312 = vld [vmem:[%s285] sm:$0xff]
        %v313 = vld [vmem:[%s285 + $0x8] sm:$0xff]
        %v314 = vpack.c.bf16 %v313, %v312
        %v315 = vld [vmem:[%s291] sm:$0xff]
        %v316 = vld [vmem:[%s291 + $0x8] sm:$0xff]
        %v317 = vld [vmem:[%s291 + $0x10] sm:$0xff]
        %v318 = vld [vmem:[%s291 + $0x18] sm:$0xff]
        %v319 = vld [vmem:[%s296] sm:$0x3]
        %v321 = vlaneseq
        %v322 = vshrl.u32 %v321, 7
        %v323 = vsub.s32 0, %v322
        %v324 = vrot.slane %v319, %v323
        %v325 = vlaneseq
        %v326 = vshrl.u32 %v325, 7
        %v327 = vsub.s32 1, %v326
        %v328 = vrot.slane %v319, %v327
        %v335 = vunpack.c.l.b16 %v315
        %v336 = vunpack.c.h.b16 %v315
        %v337 = vunpack.c.l.b16 %v316
        %v338 = vunpack.c.h.b16 %v316
        %v339 = vunpack.c.l.b16 %v317
        %v340 = vunpack.c.h.b16 %v317
        %v341 = vunpack.c.l.b16 %v318
        %v342 = vunpack.c.h.b16 %v318
        %v343 = vpack.c.b16 %v337, %v335
        %v344 = vpack.c.b16 %v338, %v336
        %v345 = vpack.c.b16 %v341, %v339
        %v346 = vpack.c.b16 %v342, %v340
        %vm351 = vcmask 261120
        %v353 = vsel %vm351, %v314, 0
        %355 = vmatprep.subr.bf16.mxu0 0
        %356 = vmatpush1.bf16.msra.mxu0 0
        %357 = vmatprep.subr.bf16.mxu0 0
        %358 = vmatpush1.bf16.msra.mxu0 0
        %359 = vmatprep.subr.bf16.mxu0 0
        %360 = vmatpush1.bf16.msra.mxu0 0
        %361 = vmatprep.subr.bf16.mxu0 0
        %362 = vmatpush1.bf16.msra.mxu0 0
        %363 = vmatprep.subr.bf16.mxu0 0
        %364 = vmatpush1.bf16.msra.mxu0 0
        %365 = vmatprep.subr.bf16.mxu0 0
        %366 = vmatpush1.bf16.msra.mxu0 0
        %367 = vmatprep.subr.bf16.mxu0 %v346
        %368 = vmatpush1.bf16.msra.mxu0 %v345
        %369 = vmatprep.subr.bf16.mxu0 %v344
        %370 = vmatpush1.bf16.msra.mxu0 %v343
        %371 = vmatprep.subr.bf16.mxu0 0
        %372 = vmatpush2.bf16.msra.mxu0 0
        %373 = vmatprep.subr.bf16.mxu0 0
        %374 = vmatpush2.bf16.msra.mxu0 0
        %375 = vmatprep.subr.bf16.mxu0 0
        %376 = vmatpush2.bf16.msra.mxu0 0
        %377 = vmatprep.subr.bf16.mxu0 0
        %378 = vmatpush2.bf16.msra.mxu0 0
        %379 = vmatprep.subr.bf16.mxu0 0
        %380 = vmatpush2.bf16.msra.mxu0 0
        %381 = vmatprep.subr.bf16.mxu0 0
        %382 = vmatpush2.bf16.msra.mxu0 0
        %383 = vmatprep.subr.bf16.mxu0 0
        %384 = vmatpush2.bf16.msra.mxu0 0
        %385 = vmatprep.subr.bf16.mxu0 0
        %386 = vmatpush2.bf16.msra.mxu0 0
        %387 = vmatprep.mubr.bf16.mxu0 0
        %388 = vmatmul.mubr.bf16.gmra.mxu0 %v353
        %v389 = vpop.f32.mrf.mxu0
        %v390 = vadd.f32 %v324, %v389
        %v391 = vpop.f32.mrf.mxu0
        %v392 = vadd.f32 %v328, %v391
        %v393 = vpop.f32.mrf.mxu0
        %v394 = vadd.f32 %v324, %v393
        %v395 = vpop.f32.mrf.mxu0
        %v396 = vadd.f32 %v328, %v395
        %397 = vdwg.mxu0
        %v398 = vmax.f32 %v390, 0.0
        %v399 = vmax.f32 %v392, 0.0
        %v400 = vmax.f32 %v394, 0.0
        %v401 = vmax.f32 %v396, 0.0
        %v402 = vld [vmem:[#allocation2] sm:$0xff]
        %v403 = vld [vmem:[#allocation2 + $0x8] sm:$0xff]
        %v404 = vpack.c.bf16 %v400, %v398
        %v405 = vpack.c.bf16 %v401, %v399
        %v406 = vld [vmem:[#allocation3] sm:$0xf]
        %v407 = vld [vmem:[#allocation3 + $0x4] sm:$0xf]
        %v408 = vld [vmem:[#allocation3 + $0x8] sm:$0xf]
        %v409 = vld [vmem:[#allocation3 + $0xc] sm:$0xf]
        %v410 = vld [vmem:[#allocation3 + $0x10] sm:$0xf]
        %v411 = vld [vmem:[#allocation3 + $0x14] sm:$0xf]
        %v412 = vld [vmem:[#allocation3 + $0x18] sm:$0xf]
        %v413 = vld [vmem:[#allocation3 + $0x1c] sm:$0xf]
        %v414 = vld [vmem:[#allocation3 + $0x20] sm:$0xf]
        %v415 = vld [vmem:[#allocation3 + $0x24] sm:$0xf]
        %v416 = vld [vmem:[#allocation3 + $0x28] sm:$0xf]
        %v417 = vld [vmem:[#allocation3 + $0x2c] sm:$0xf]
        %v418 = vld [vmem:[#allocation3 + $0x30] sm:$0xf]
        %v419 = vld [vmem:[#allocation3 + $0x34] sm:$0xf]
        %v420 = vld [vmem:[#allocation3 + $0x38] sm:$0xf]
        %v421 = vld [vmem:[#allocation3 + $0x3c] sm:$0xf]
        %v422 = vld [vmem:[#allocation3 + $0x40] sm:$0xf]
        %v423 = vld [vmem:[#allocation3 + $0x44] sm:$0xf]
        %v424 = vld [vmem:[#allocation3 + $0x48] sm:$0xf]
        %v425 = vld [vmem:[#allocation3 + $0x4c] sm:$0xf]
        %v426 = vld [vmem:[#allocation3 + $0x50] sm:$0xf]
        %v427 = vld [vmem:[#allocation3 + $0x54] sm:$0xf]
        %v428 = vld [vmem:[#allocation3 + $0x58] sm:$0xf]
        %v429 = vld [vmem:[#allocation3 + $0x5c] sm:$0xf]
        %v430 = vld [vmem:[#allocation3 + $0x60] sm:$0xf]
        %v431 = vld [vmem:[#allocation3 + $0x64] sm:$0xf]
        %v432 = vld [vmem:[#allocation3 + $0x68] sm:$0xf]
        %v433 = vld [vmem:[#allocation3 + $0x6c] sm:$0xf]
        %v434 = vld [vmem:[#allocation3 + $0x70] sm:$0xf]
        %v435 = vld [vmem:[#allocation3 + $0x74] sm:$0xf]
        %v436 = vld [vmem:[#allocation3 + $0x78] sm:$0xf]
        %v437 = vld [vmem:[#allocation3 + $0x7c] sm:$0xf]
        %v470 = vunpack.c.l.b16 %v406
        %v471 = vunpack.c.l.b16 %v407
        %v472 = vunpack.c.l.b16 %v408
        %v473 = vunpack.c.l.b16 %v409
        %v474 = vunpack.c.l.b16 %v410
        %v475 = vunpack.c.l.b16 %v411
        %v476 = vunpack.c.l.b16 %v412
        %v477 = vunpack.c.l.b16 %v413
        %v478 = vunpack.c.l.b16 %v414
        %v479 = vunpack.c.l.b16 %v415
        %v480 = vunpack.c.l.b16 %v416
        %v481 = vunpack.c.l.b16 %v417
        %v482 = vunpack.c.l.b16 %v418
        %v483 = vunpack.c.l.b16 %v419
        %v484 = vunpack.c.l.b16 %v420
        %v485 = vunpack.c.l.b16 %v421
        %v486 = vunpack.c.l.b16 %v422
        %v487 = vunpack.c.l.b16 %v423
        %v488 = vunpack.c.l.b16 %v424
        %v489 = vunpack.c.l.b16 %v425
        %v490 = vunpack.c.l.b16 %v426
        %v491 = vunpack.c.l.b16 %v427
        %v492 = vunpack.c.l.b16 %v428
        %v493 = vunpack.c.l.b16 %v429
        %v494 = vunpack.c.l.b16 %v430
        %v495 = vunpack.c.l.b16 %v431
        %v496 = vunpack.c.l.b16 %v432
        %v497 = vunpack.c.l.b16 %v433
        %v498 = vunpack.c.l.b16 %v434
        %v499 = vunpack.c.l.b16 %v435
        %v500 = vunpack.c.l.b16 %v436
        %v501 = vunpack.c.l.b16 %v437
        %v502 = vpack.c.b16 %v471, %v470
        %v503 = vpack.c.b16 %v473, %v472
        %v504 = vpack.c.b16 %v475, %v474
        %v505 = vpack.c.b16 %v477, %v476
        %v506 = vpack.c.b16 %v479, %v478
        %v507 = vpack.c.b16 %v481, %v480
        %v508 = vpack.c.b16 %v483, %v482
        %v509 = vpack.c.b16 %v485, %v484
        %v510 = vpack.c.b16 %v487, %v486
        %v511 = vpack.c.b16 %v489, %v488
        %v512 = vpack.c.b16 %v491, %v490
        %v513 = vpack.c.b16 %v493, %v492
        %v514 = vpack.c.b16 %v495, %v494
        %v515 = vpack.c.b16 %v497, %v496
        %v516 = vpack.c.b16 %v499, %v498
        %v517 = vpack.c.b16 %v501, %v500
        %534 = vmatprep.subr.bf16.mxu0 0
        %535 = vmatpush1.bf16.msra.mxu0 %v509
        %536 = vmatprep.subr.bf16.mxu0 0
        %537 = vmatpush1.bf16.msra.mxu0 %v508
        %538 = vmatprep.subr.bf16.mxu0 0
        %539 = vmatpush1.bf16.msra.mxu0 %v507
        %540 = vmatprep.subr.bf16.mxu0 0
        %541 = vmatpush1.bf16.msra.mxu0 %v506
        %542 = vmatprep.subr.bf16.mxu0 0
        %543 = vmatpush1.bf16.msra.mxu0 %v505
        %544 = vmatprep.subr.bf16.mxu0 0
        %545 = vmatpush1.bf16.msra.mxu0 %v504
        %546 = vmatprep.subr.bf16.mxu0 0
        %547 = vmatpush1.bf16.msra.mxu0 %v503
        %548 = vmatprep.subr.bf16.mxu0 0
        %549 = vmatpush1.bf16.msra.mxu0 %v502
        %550 = vmatprep.subr.bf16.mxu0 0
        %551 = vmatpush2.bf16.msra.mxu0 %v517
        %552 = vmatprep.subr.bf16.mxu0 0
        %553 = vmatpush2.bf16.msra.mxu0 %v516
        %554 = vmatprep.subr.bf16.mxu0 0
        %555 = vmatpush2.bf16.msra.mxu0 %v515
        %556 = vmatprep.subr.bf16.mxu0 0
        %557 = vmatpush2.bf16.msra.mxu0 %v514
        %558 = vmatprep.subr.bf16.mxu0 0
        %559 = vmatpush2.bf16.msra.mxu0 %v513
        %560 = vmatprep.subr.bf16.mxu0 0
        %561 = vmatpush2.bf16.msra.mxu0 %v512
        %562 = vmatprep.subr.bf16.mxu0 0
        %563 = vmatpush2.bf16.msra.mxu0 %v511
        %564 = vmatprep.subr.bf16.mxu0 0
        %565 = vmatpush2.bf16.msra.mxu0 %v510
        %566 = vmatprep.mubr.bf16.mxu0 %v405
        %567 = vmatmul.mubr.bf16.gmra.mxu0 %v404
        %v568 = vpop.f32.mrf.mxu0
        %v569 = vadd.f32 0.0, %v568
        %v570 = vpop.f32.mrf.mxu0
        %v571 = vpop.f32.mrf.mxu0
        %v572 = vadd.f32 0.0, %v571
        %v573 = vpop.f32.mrf.mxu0
        %574 = vdwg.mxu0
        %v575 = vadd.f32 %v402, %v569
        %v576 = vadd.f32 %v403, %v572
        %577 = vst [vmem:[#allocation2] sm:$0xff] %v575
        %578 = vst [vmem:[#allocation2 + $0x8] sm:$0xff] %v576
        // Predicated region
        $region49: #{mlp_forward_pallas.1} parent=39 // pred_check
          %p579 = pneg %p306
        $region50: #{mlp_forward_pallas.1} parent=39 // pred_check_branch
          %581 = sbr.rel (%p579) target = $region52
        $region51: #{mlp_forward_pallas.1} parent=39 // pred_region
          %v582 = vld [vmem:[#allocation2] sm:$0xff]
          %v583 = vld [vmem:[#allocation2 + $0x8] sm:$0xff]
          %v584 = vld [vmem:[%s4] sm:$0x1]
          %v586 = vlaneseq
          %v587 = vshrl.u32 %v586, 7
          %v588 = vsub.s32 0, %v587
          %v589 = vrot.slane %v584, %v588
          %v591 = vadd.f32 %v582, %v589
          %v592 = vadd.f32 %v583, %v589
          %593 = vst [vmem:[%s303] sm:$0xff] %v591
          %594 = vst [vmem:[%s303 + $0x8] sm:$0xff] %v592
        $region52: #{mlp_forward_pallas.1} parent=39 // pred_fallthru
          _
        %s595 = smul.u32 2, %s21
        %p596 = scmp.lt.s32.totalorder %s595, 7
        %s597 = scalar_select %p596, %s595, 7
        %s598 = smul.addr %s597, 8
        %s599 = scalar_lea.vmem %s5, %s598
        // Predicated region
        $region53: #{mlp_forward_pallas.1} parent=39 // pred_check
          %p600 = pneg %p172
        $region54: #{mlp_forward_pallas.1} parent=39 // pred_check_branch
          %602 = sbr.rel (%p600) target = $region56
        $region55: #{mlp_forward_pallas.1} parent=39 // pred_region
          %s603 = smul.u32 2, %s21
        $region56: #{mlp_forward_pallas.1} parent=39 // pred_fallthru
          _
      $region40: #{mlp_forward_pallas.1} parent=5 // pred_fallthru
        _
      %p604 = scmp.le.s32.totalorder 2, %s12
      // Predicated region
      $region57: #{mlp_forward_pallas.1} parent=5 // pred_check
        %p605 = pneg %p604
      $region58: #{mlp_forward_pallas.1} parent=5 // pred_check_branch
        %607 = sbr.rel (%p605) target = $region60
      $region59: #{mlp_forward_pallas.1} parent=5 // pred_region
        %s608 = ssub.s32 %s12, 2
        // Predicated region
        $region61: #{mlp_forward_pallas.1} parent=59 // pred_check
          %p609 = pneg %p178
        $region62: #{mlp_forward_pallas.1} parent=59 // pred_check_branch
          %611 = sbr.rel (%p609) target = $region64
        $region63: #{mlp_forward_pallas.1} parent=59 // pred_region
          %s612 = smul.u32 2, %s23
          %p613 = scmp.lt.s32.totalorder %s612, 7
          %s614 = scalar_select %p613, %s612, 7
          %s615 = smul.addr %s614, 8
          %s616 = scalar_lea.vmem %s5, %s615
        $region64: #{mlp_forward_pallas.1} parent=59 // pred_fallthru
          _
      $region60: #{mlp_forward_pallas.1} parent=5 // pred_fallthru
        _
    $region6: #{mlp_forward_pallas.1} parent=1 // loop_footer
      %s16 = sadd.s32 1, %s12
    $region7: #{mlp_forward_pallas.1} parent=1 // loop_footer_branch
      %11 = sbr.rel target = $region3
    $region8: #{mlp_forward_pallas.1} parent=1 // loop_exit
      _
    %617 = vsyncpa [#allocation4], 1
    %s618 = scalar_lea.sflag [#allocation4], 1
    %619 = vsyncpa %s618, 1

</llo_original>
